<compile_context>
chip_gen: v7x
topology: tpu7x:2x2x1
jax: 0.10.0
libtpu: 0.0.40
codegen_flags: <defaults>
</compile_context>

<pallas_src>
import functools

import jax
import jax.numpy as jnp
from jax import lax
from jax.experimental import pallas as pl
from jax.experimental.pallas import tpu as pltpu


def lstm_kernel(x_ref, w_ih_ref, w_hh_ref, b_ref, w_out_ref, h0_ref, c0_ref,
                out_ref, xp_scr, h_all_scr, *, hidden_size, seq_len,
                unroll_threshold=64):
    """Fused LSTM recurrence + bias-free output head, all T steps in one kernel call.

    x_ref     : (T, 1)   f32  (I == 1)
    w_ih_ref  : (1, 4H)  f32  (weight_ih_l0^T row, i/f/o columns pre-scaled by 0.5)
    w_hh_ref  : (H, 4H)  f32  (weight_hh_l0^T, i/f/o columns pre-scaled by 0.5)
    b_ref     : (1, 4H)  f32  (bias_ih + bias_hh, i/f/o columns pre-scaled by 0.5)
    w_out_ref : (1, H)   f32  (Linear weight as a row)
    h0/c0_ref : (1, H)   f32
    out_ref   : (T, 1)   f32
    xp_scr    : VMEM (T, 4H) f32 -- staged input projection, read per step via vld.
    h_all_scr : VMEM (T, H)  f32 -- write-only parking for h_t (off the serial chain).
    """
    H = hidden_size

    # --- One-shot input projection for all T steps (I == 1 -> plain 2-D broadcast),
    #     staged to VMEM so per-step row reads use the vld slot, not the XLU.
    xp_scr[...] = x_ref[...] * w_ih_ref[...] + b_ref[...]            # (T, 4H)

    w_hh = w_hh_ref[...]                                             # (H, 4H)
    h = h0_ref[...]                                                  # (1, H), lives in vregs
    c = c0_ref[...]                                                  # (1, H), lives in vregs

    def step(t, h, c):
        # Gate pre-activations, PyTorch gate order (i, f, g, o); i/f/o pre-scaled by 0.5.
        # h @ W_hh on VPU + sublane reduce -- deliberately NOT an MXU dot (see header).
        hWhh = jnp.sum(h[:, :, None] * w_hh[None, :, :], axis=1)     # (1, 4H)
        gates = xp_scr[pl.ds(t, 1), :] + hWhh                        # (1, 4H)
        tg = jnp.tanh(gates)                                         # EUP tanh #1
        sg = 0.5 * tg + 0.5                                          # sigmoid(z) = 0.5 + 0.5*tanh(z/2)
        i = sg[:, 0:H]
        f = sg[:, H:2 * H]
        g = tg[:, 2 * H:3 * H]                                       # true tanh gate (unscaled column)
        o = sg[:, 3 * H:4 * H]
        c = f * c + i * g
        h = o * jnp.tanh(c)                                          # EUP tanh #2
        h_all_scr[pl.ds(t, 1), :] = h                                # write-only; next step uses vreg h
        return h, c

    if seq_len <= unroll_threshold:
        # Fully unrolled: the LLO scheduler sees the whole dependency chain.
        for t in range(seq_len):
            h, c = step(t, h, c)
    else:
        # Long sequences: bound live ranges, keep enough visibility to hide EUP latency.
        def body(t, carry):
            return step(t, carry[0], carry[1])
        h, c = lax.fori_loop(0, seq_len, body, (h, c), unroll=8)

    # --- Deferred bias-free output head: one 2-D broadcast + lane reduce, one store.
    out_ref[...] = jnp.sum(h_all_scr[...] * w_out_ref[...], axis=1, keepdims=True)  # (T, 1)


def stock_lstm_forward(x, params, h0, c0):
    """x: (T, B=1, I=1); params: output of `pack_params` (pre-scaled, packed once)."""
    T, B, I = x.shape
    if B != 1:
        raise ValueError("stock_lstm uses batch_size == 1 (as in the reference module)")
    if I != 1:
        raise ValueError("stock_lstm uses input_size == 1 (final .view(T) requires it)")
    H = params["w_hh_T"].shape[0]

    kernel = functools.partial(lstm_kernel, hidden_size=H, seq_len=T)
    out = pl.pallas_call(
        kernel,
        out_shape=jax.ShapeDtypeStruct((T, 1), jnp.float32),
        in_specs=[pl.BlockSpec(memory_space=pltpu.MemorySpace.VMEM)] * 7,
        out_specs=pl.BlockSpec(memory_space=pltpu.MemorySpace.VMEM),
        scratch_shapes=[pltpu.VMEM((T, 4 * H), jnp.float32),   # staged x-projection
                        pltpu.VMEM((T, H), jnp.float32)],       # parked h_t
    )(x.reshape(T, 1),
      params["w_ih_row"],
      params["w_hh_T"],
      params["b"],
      params["w_out_row"],
      h0, c0)
    # Matches `self.nl(output_data).view(output_data.shape[0])` (B == I == 1).
    return out.reshape(T)


def pack_params(raw, hidden_size):
    """One-time packing: fold the sigmoid-via-tanh pre-scale (z -> z/2) into the i/f/o
    gate columns so the kernel needs a single tanh for all three sigmoid gates, and lay
    out the I==1 projections as plain rows.  Call once; reuse across forward calls."""
    H = hidden_size
    gate_scale = jnp.concatenate([
        jnp.full((2 * H,), 0.5, jnp.float32),   # i, f
        jnp.ones((H,), jnp.float32),            # g (stays a real tanh)
        jnp.full((H,), 0.5, jnp.float32),       # o
    ])[None, :]                                  # (1, 4H)
    return {
        "w_ih_row": raw["w_ih_T"] * gate_scale,          # (1, 4H)   (I == 1)
        "w_hh_T": raw["w_hh_T"] * gate_scale,            # (H, 4H)
        "b": raw["b"] * gate_scale,                      # (1, 4H)
        "w_out_row": raw["w_out_T"].reshape(1, H),       # (1, H)    (I == 1)
    }


def lstm_reference(x, raw, h0, c0):
    """Pure-JAX reference with identical PyTorch LSTM semantics (unscaled params)."""
    H = h0.shape[-1]
    w_ih_T, w_hh_T, b, w_out_T = raw["w_ih_T"], raw["w_hh_T"], raw["b"], raw["w_out_T"]

    def step(carry, xt):
        h, c = carry
        gates = xt @ w_ih_T + h @ w_hh_T + b
        i = jax.nn.sigmoid(gates[:, 0:H])
        f = jax.nn.sigmoid(gates[:, H:2 * H])
        g = jnp.tanh(gates[:, 2 * H:3 * H])
        o = jax.nn.sigmoid(gates[:, 3 * H:4 * H])
        c = f * c + i * g
        h = o * jnp.tanh(c)
        return (h, c), h @ w_out_T

    _, ys = lax.scan(step, (h0, c0), x)
    return ys.reshape(x.shape[0])


def init_params(key, input_size, hidden_size):
    """Deterministic init mimicking PyTorch's U(-1/sqrt(H), 1/sqrt(H)). Returns raw
    (unscaled) params in transposed layout; feed to `pack_params` for the kernel."""
    k = 1.0 / jnp.sqrt(jnp.float32(hidden_size))
    ks = jax.random.split(key, 5)
    w_ih = jax.random.uniform(ks[0], (4 * hidden_size, input_size), jnp.float32, -k, k)
    w_hh = jax.random.uniform(ks[1], (4 * hidden_size, hidden_size), jnp.float32, -k, k)
    b_ih = jax.random.uniform(ks[2], (4 * hidden_size,), jnp.float32, -k, k)
    b_hh = jax.random.uniform(ks[3], (4 * hidden_size,), jnp.float32, -k, k)
    w_out = jax.random.uniform(ks[4], (input_size, hidden_size), jnp.float32, -k, k)
    return {
        "w_ih_T": w_ih.T,                                   # (I, 4H)
        "w_hh_T": w_hh.T,                                   # (H, 4H)
        "b": (b_ih + b_hh).reshape(1, 4 * hidden_size),     # (1, 4H)
        "w_out_T": w_out.T,                                 # (H, I)
    }


if __name__ == "__main__":
    # TODO(synk): baostock data loading / pandas preprocessing and the torch.randn h0/c0
    # draw from the original script are host-side setup, not kernel work; we synthesize
    # deterministic equivalents here.
    input_size = 1
    hidden_size = 8
    batch_size = 1
    seq_len = 16

    root = jax.random.PRNGKey(0)
    k_params, k_x, k_h0, k_c0 = jax.random.split(root, 4)

    raw_params = init_params(k_params, input_size, hidden_size)
    packed_params = pack_params(raw_params, hidden_size)   # one-time fold; reused per call

    # c3_1 analogue: (T, batch=1, input=1), scaled like `10 * tensor(...)`.
    x = 10.0 * jax.random.normal(k_x, (seq_len, batch_size, input_size), jnp.float32)
    # forward() draws randn h0/c0 of shape (input_size, batch, hidden) == (1, B, H).
    h0 = jax.random.normal(k_h0, (batch_size, hidden_size), jnp.float32)
    c0 = jax.random.normal(k_c0, (batch_size, hidden_size), jnp.float32)

    forward = jax.jit(stock_lstm_forward)
    out = forward(x, packed_params, h0, c0)
    out = jax.block_until_ready(out)

    ref = lstm_reference(x, raw_params, h0, c0)
    assert out.shape == (seq_len,)
    assert jnp.allclose(out, ref, atol=1e-4, rtol=1e-4), (out, ref)

    print("KERNEL_OK")
</pallas_src>

<mosaic_0001>
module attributes {stable_mosaic.version = 11 : i64} {
  func.func @lstm_kernel(%arg0: memref<16x1xf32, #tpu.memory_space<vmem>>, %arg1: memref<1x32xf32, #tpu.memory_space<vmem>>, %arg2: memref<8x32xf32, #tpu.memory_space<vmem>>, %arg3: memref<1x32xf32, #tpu.memory_space<vmem>>, %arg4: memref<1x8xf32, #tpu.memory_space<vmem>>, %arg5: memref<1x8xf32, #tpu.memory_space<vmem>>, %arg6: memref<1x8xf32, #tpu.memory_space<vmem>>, %arg7: memref<16x1xf32, #tpu.memory_space<vmem>>, %arg8: memref<16x32xf32, #tpu.memory_space<vmem>>, %arg9: memref<16x8xf32, #tpu.memory_space<vmem>>) attributes {dimension_semantics = [], scalar_prefetch = 0 : i64, scratch_operands = 2 : i64, tpu.core_type = #tpu.core_type<tc>} {
    %c0 = arith.constant 0 : index
    %c0_0 = arith.constant 0 : index
    %0 = vector.load %arg0[%c0, %c0_0] : memref<16x1xf32, #tpu.memory_space<vmem>>, vector<16x1xf32>
    %c0_1 = arith.constant 0 : index
    %c0_2 = arith.constant 0 : index
    %1 = vector.load %arg1[%c0_1, %c0_2] : memref<1x32xf32, #tpu.memory_space<vmem>>, vector<1x32xf32>
    %2 = vector.broadcast %0 : vector<16x1xf32> to vector<16x32xf32>
    %3 = vector.broadcast %1 : vector<1x32xf32> to vector<16x32xf32>
    %4 = arith.mulf %2, %3 : vector<16x32xf32>
    %c0_3 = arith.constant 0 : index
    %c0_4 = arith.constant 0 : index
    %5 = vector.load %arg3[%c0_3, %c0_4] : memref<1x32xf32, #tpu.memory_space<vmem>>, vector<1x32xf32>
    %6 = vector.broadcast %5 : vector<1x32xf32> to vector<16x32xf32>
    %7 = arith.addf %4, %6 : vector<16x32xf32>
    %c0_5 = arith.constant 0 : index
    %c0_6 = arith.constant 0 : index
    %8 = vector.load %arg8[%c0_5, %c0_6] : memref<16x32xf32, #tpu.memory_space<vmem>>, vector<16x32xf32>
    tpu.vector_store %arg8[%c0_5, %c0_6], %7 {strides = array<i32>} : memref<16x32xf32, #tpu.memory_space<vmem>>, vector<16x32xf32>,
    %c0_7 = arith.constant 0 : index
    %c0_8 = arith.constant 0 : index
    %9 = vector.load %arg2[%c0_7, %c0_8] : memref<8x32xf32, #tpu.memory_space<vmem>>, vector<8x32xf32>
    %c0_9 = arith.constant 0 : index
    %c0_10 = arith.constant 0 : index
    %10 = vector.load %arg5[%c0_9, %c0_10] : memref<1x8xf32, #tpu.memory_space<vmem>>, vector<1x8xf32>
    %c0_11 = arith.constant 0 : index
    %c0_12 = arith.constant 0 : index
    %11 = vector.load %arg6[%c0_11, %c0_12] : memref<1x8xf32, #tpu.memory_space<vmem>>, vector<1x8xf32>
    %12 = vector.shape_cast %10 : vector<1x8xf32> to vector<1x8x1xf32>
    %13 = vector.shape_cast %9 : vector<8x32xf32> to vector<1x8x32xf32>
    %14 = vector.broadcast %12 : vector<1x8x1xf32> to vector<1x8x32xf32>
    %15 = arith.mulf %14, %13 : vector<1x8x32xf32>
    %cst = arith.constant dense<0.000000e+00> : vector<1x32xf32>
    %16 = vector.multi_reduction <add>, %15, %cst [1] : vector<1x8x32xf32> to vector<1x32xf32>
    %c0_13 = arith.constant 0 : index
    %c0_14 = arith.constant 0 : index
    %17 = vector.load %arg8[%c0_13, %c0_14] : memref<16x32xf32, #tpu.memory_space<vmem>>, vector<1x32xf32>
    %18 = arith.addf %17, %16 : vector<1x32xf32>
    %19 = math.tanh %18 : vector<1x32xf32>
    %cst_15 = arith.constant 5.000000e-01 : f32
    %20 = vector.broadcast %cst_15 : f32 to vector<1x32xf32>
    %21 = arith.mulf %20, %19 : vector<1x32xf32>
    %cst_16 = arith.constant 5.000000e-01 : f32
    %22 = vector.broadcast %cst_16 : f32 to vector<1x32xf32>
    %23 = arith.addf %21, %22 : vector<1x32xf32>
    %24 = vector.extract_strided_slice %23 {offsets = [0, 0], sizes = [1, 8], strides = [1, 1]} : vector<1x32xf32> to vector<1x8xf32>
    %25 = vector.extract_strided_slice %23 {offsets = [0, 8], sizes = [1, 8], strides = [1, 1]} : vector<1x32xf32> to vector<1x8xf32>
    %26 = vector.extract_strided_slice %19 {offsets = [0, 16], sizes = [1, 8], strides = [1, 1]} : vector<1x32xf32> to vector<1x8xf32>
    %27 = vector.extract_strided_slice %23 {offsets = [0, 24], sizes = [1, 8], strides = [1, 1]} : vector<1x32xf32> to vector<1x8xf32>
    %28 = arith.mulf %25, %11 : vector<1x8xf32>
    %29 = arith.mulf %24, %26 : vector<1x8xf32>
    %30 = arith.addf %28, %29 : vector<1x8xf32>
    %31 = math.tanh %30 : vector<1x8xf32>
    %32 = arith.mulf %27, %31 : vector<1x8xf32>
    %c0_17 = arith.constant 0 : index
    %c0_18 = arith.constant 0 : index
    %33 = vector.load %arg9[%c0_17, %c0_18] : memref<16x8xf32, #tpu.memory_space<vmem>>, vector<1x8xf32>
    tpu.vector_store %arg9[%c0_17, %c0_18], %32 {strides = array<i32>} : memref<16x8xf32, #tpu.memory_space<vmem>>, vector<1x8xf32>,
    %34 = vector.shape_cast %32 : vector<1x8xf32> to vector<1x8x1xf32>
    %35 = vector.shape_cast %9 : vector<8x32xf32> to vector<1x8x32xf32>
    %36 = vector.broadcast %34 : vector<1x8x1xf32> to vector<1x8x32xf32>
    %37 = arith.mulf %36, %35 : vector<1x8x32xf32>
    %cst_19 = arith.constant dense<0.000000e+00> : vector<1x32xf32>
    %38 = vector.multi_reduction <add>, %37, %cst_19 [1] : vector<1x8x32xf32> to vector<1x32xf32>
    %c1 = arith.constant 1 : index
    %c0_20 = arith.constant 0 : index
    %39 = vector.load %arg8[%c1, %c0_20] : memref<16x32xf32, #tpu.memory_space<vmem>>, vector<1x32xf32>
    %40 = arith.addf %39, %38 : vector<1x32xf32>
    %41 = math.tanh %40 : vector<1x32xf32>
    %cst_21 = arith.constant 5.000000e-01 : f32
    %42 = vector.broadcast %cst_21 : f32 to vector<1x32xf32>
    %43 = arith.mulf %42, %41 : vector<1x32xf32>
    %cst_22 = arith.constant 5.000000e-01 : f32
    %44 = vector.broadcast %cst_22 : f32 to vector<1x32xf32>
    %45 = arith.addf %43, %44 : vector<1x32xf32>
    %46 = vector.extract_strided_slice %45 {offsets = [0, 0], sizes = [1, 8], strides = [1, 1]} : vector<1x32xf32> to vector<1x8xf32>
    %47 = vector.extract_strided_slice %45 {offsets = [0, 8], sizes = [1, 8], strides = [1, 1]} : vector<1x32xf32> to vector<1x8xf32>
    %48 = vector.extract_strided_slice %41 {offsets = [0, 16], sizes = [1, 8], strides = [1, 1]} : vector<1x32xf32> to vector<1x8xf32>
    %49 = vector.extract_strided_slice %45 {offsets = [0, 24], sizes = [1, 8], strides = [1, 1]} : vector<1x32xf32> to vector<1x8xf32>
    %50 = arith.mulf %47, %30 : vector<1x8xf32>
    %51 = arith.mulf %46, %48 : vector<1x8xf32>
    %52 = arith.addf %50, %51 : vector<1x8xf32>
    %53 = math.tanh %52 : vector<1x8xf32>
    %54 = arith.mulf %49, %53 : vector<1x8xf32>
    %c1_23 = arith.constant 1 : index
    %c0_24 = arith.constant 0 : index
    %55 = vector.load %arg9[%c1_23, %c0_24] : memref<16x8xf32, #tpu.memory_space<vmem>>, vector<1x8xf32>
    tpu.vector_store %arg9[%c1_23, %c0_24], %54 {strides = array<i32>} : memref<16x8xf32, #tpu.memory_space<vmem>>, vector<1x8xf32>,
    %56 = vector.shape_cast %54 : vector<1x8xf32> to vector<1x8x1xf32>
    %57 = vector.shape_cast %9 : vector<8x32xf32> to vector<1x8x32xf32>
    %58 = vector.broadcast %56 : vector<1x8x1xf32> to vector<1x8x32xf32>
    %59 = arith.mulf %58, %57 : vector<1x8x32xf32>
    %cst_25 = arith.constant dense<0.000000e+00> : vector<1x32xf32>
    %60 = vector.multi_reduction <add>, %59, %cst_25 [1] : vector<1x8x32xf32> to vector<1x32xf32>
    %c2 = arith.constant 2 : index
    %c0_26 = arith.constant 0 : index
    %61 = vector.load %arg8[%c2, %c0_26] : memref<16x32xf32, #tpu.memory_space<vmem>>, vector<1x32xf32>
    %62 = arith.addf %61, %60 : vector<1x32xf32>
    %63 = math.tanh %62 : vector<1x32xf32>
    %cst_27 = arith.constant 5.000000e-01 : f32
    %64 = vector.broadcast %cst_27 : f32 to vector<1x32xf32>
    %65 = arith.mulf %64, %63 : vector<1x32xf32>
    %cst_28 = arith.constant 5.000000e-01 : f32
    %66 = vector.broadcast %cst_28 : f32 to vector<1x32xf32>
    %67 = arith.addf %65, %66 : vector<1x32xf32>
    %68 = vector.extract_strided_slice %67 {offsets = [0, 0], sizes = [1, 8], strides = [1, 1]} : vector<1x32xf32> to vector<1x8xf32>
    %69 = vector.extract_strided_slice %67 {offsets = [0, 8], sizes = [1, 8], strides = [1, 1]} : vector<1x32xf32> to vector<1x8xf32>
    %70 = vector.extract_strided_slice %63 {offsets = [0, 16], sizes = [1, 8], strides = [1, 1]} : vector<1x32xf32> to vector<1x8xf32>
    %71 = vector.extract_strided_slice %67 {offsets = [0, 24], sizes = [1, 8], strides = [1, 1]} : vector<1x32xf32> to vector<1x8xf32>
    %72 = arith.mulf %69, %52 : vector<1x8xf32>
    %73 = arith.mulf %68, %70 : vector<1x8xf32>
    %74 = arith.addf %72, %73 : vector<1x8xf32>
    %75 = math.tanh %74 : vector<1x8xf32>
    %76 = arith.mulf %71, %75 : vector<1x8xf32>
    %c2_29 = arith.constant 2 : index
    %c0_30 = arith.constant 0 : index
    %77 = vector.load %arg9[%c2_29, %c0_30] : memref<16x8xf32, #tpu.memory_space<vmem>>, vector<1x8xf32>
    tpu.vector_store %arg9[%c2_29, %c0_30], %76 {strides = array<i32>} : memref<16x8xf32, #tpu.memory_space<vmem>>, vector<1x8xf32>,
    %78 = vector.shape_cast %76 : vector<1x8xf32> to vector<1x8x1xf32>
    %79 = vector.shape_cast %9 : vector<8x32xf32> to vector<1x8x32xf32>
    %80 = vector.broadcast %78 : vector<1x8x1xf32> to vector<1x8x32xf32>
    %81 = arith.mulf %80, %79 : vector<1x8x32xf32>
    %cst_31 = arith.constant dense<0.000000e+00> : vector<1x32xf32>
    %82 = vector.multi_reduction <add>, %81, %cst_31 [1] : vector<1x8x32xf32> to vector<1x32xf32>
    %c3 = arith.constant 3 : index
    %c0_32 = arith.constant 0 : index
    %83 = vector.load %arg8[%c3, %c0_32] : memref<16x32xf32, #tpu.memory_space<vmem>>, vector<1x32xf32>
    %84 = arith.addf %83, %82 : vector<1x32xf32>
    %85 = math.tanh %84 : vector<1x32xf32>
    %cst_33 = arith.constant 5.000000e-01 : f32
    %86 = vector.broadcast %cst_33 : f32 to vector<1x32xf32>
    %87 = arith.mulf %86, %85 : vector<1x32xf32>
    %cst_34 = arith.constant 5.000000e-01 : f32
    %88 = vector.broadcast %cst_34 : f32 to vector<1x32xf32>
    %89 = arith.addf %87, %88 : vector<1x32xf32>
    %90 = vector.extract_strided_slice %89 {offsets = [0, 0], sizes = [1, 8], strides = [1, 1]} : vector<1x32xf32> to vector<1x8xf32>
    %91 = vector.extract_strided_slice %89 {offsets = [0, 8], sizes = [1, 8], strides = [1, 1]} : vector<1x32xf32> to vector<1x8xf32>
    %92 = vector.extract_strided_slice %85 {offsets = [0, 16], sizes = [1, 8], strides = [1, 1]} : vector<1x32xf32> to vector<1x8xf32>
    %93 = vector.extract_strided_slice %89 {offsets = [0, 24], sizes = [1, 8], strides = [1, 1]} : vector<1x32xf32> to vector<1x8xf32>
    %94 = arith.mulf %91, %74 : vector<1x8xf32>
    %95 = arith.mulf %90, %92 : vector<1x8xf32>
    %96 = arith.addf %94, %95 : vector<1x8xf32>
    %97 = math.tanh %96 : vector<1x8xf32>
    %98 = arith.mulf %93, %97 : vector<1x8xf32>
    %c3_35 = arith.constant 3 : index
    %c0_36 = arith.constant 0 : index
    %99 = vector.load %arg9[%c3_35, %c0_36] : memref<16x8xf32, #tpu.memory_space<vmem>>, vector<1x8xf32>
    tpu.vector_store %arg9[%c3_35, %c0_36], %98 {strides = array<i32>} : memref<16x8xf32, #tpu.memory_space<vmem>>, vector<1x8xf32>,
    %100 = vector.shape_cast %98 : vector<1x8xf32> to vector<1x8x1xf32>
    %101 = vector.shape_cast %9 : vector<8x32xf32> to vector<1x8x32xf32>
    %102 = vector.broadcast %100 : vector<1x8x1xf32> to vector<1x8x32xf32>
    %103 = arith.mulf %102, %101 : vector<1x8x32xf32>
    %cst_37 = arith.constant dense<0.000000e+00> : vector<1x32xf32>
    %104 = vector.multi_reduction <add>, %103, %cst_37 [1] : vector<1x8x32xf32> to vector<1x32xf32>
    %c4 = arith.constant 4 : index
    %c0_38 = arith.constant 0 : index
    %105 = vector.load %arg8[%c4, %c0_38] : memref<16x32xf32, #tpu.memory_space<vmem>>, vector<1x32xf32>
    %106 = arith.addf %105, %104 : vector<1x32xf32>
    %107 = math.tanh %106 : vector<1x32xf32>
    %cst_39 = arith.constant 5.000000e-01 : f32
    %108 = vector.broadcast %cst_39 : f32 to vector<1x32xf32>
    %109 = arith.mulf %108, %107 : vector<1x32xf32>
    %cst_40 = arith.constant 5.000000e-01 : f32
    %110 = vector.broadcast %cst_40 : f32 to vector<1x32xf32>
    %111 = arith.addf %109, %110 : vector<1x32xf32>
    %112 = vector.extract_strided_slice %111 {offsets = [0, 0], sizes = [1, 8], strides = [1, 1]} : vector<1x32xf32> to vector<1x8xf32>
    %113 = vector.extract_strided_slice %111 {offsets = [0, 8], sizes = [1, 8], strides = [1, 1]} : vector<1x32xf32> to vector<1x8xf32>
    %114 = vector.extract_strided_slice %107 {offsets = [0, 16], sizes = [1, 8], strides = [1, 1]} : vector<1x32xf32> to vector<1x8xf32>
    %115 = vector.extract_strided_slice %111 {offsets = [0, 24], sizes = [1, 8], strides = [1, 1]} : vector<1x32xf32> to vector<1x8xf32>
    %116 = arith.mulf %113, %96 : vector<1x8xf32>
    %117 = arith.mulf %112, %114 : vector<1x8xf32>
    %118 = arith.addf %116, %117 : vector<1x8xf32>
    %119 = math.tanh %118 : vector<1x8xf32>
    %120 = arith.mulf %115, %119 : vector<1x8xf32>
    %c4_41 = arith.constant 4 : index
    %c0_42 = arith.constant 0 : index
    %121 = vector.load %arg9[%c4_41, %c0_42] : memref<16x8xf32, #tpu.memory_space<vmem>>, vector<1x8xf32>
    tpu.vector_store %arg9[%c4_41, %c0_42], %120 {strides = array<i32>} : memref<16x8xf32, #tpu.memory_space<vmem>>, vector<1x8xf32>,
    %122 = vector.shape_cast %120 : vector<1x8xf32> to vector<1x8x1xf32>
    %123 = vector.shape_cast %9 : vector<8x32xf32> to vector<1x8x32xf32>
    %124 = vector.broadcast %122 : vector<1x8x1xf32> to vector<1x8x32xf32>
    %125 = arith.mulf %124, %123 : vector<1x8x32xf32>
    %cst_43 = arith.constant dense<0.000000e+00> : vector<1x32xf32>
    %126 = vector.multi_reduction <add>, %125, %cst_43 [1] : vector<1x8x32xf32> to vector<1x32xf32>
    %c5 = arith.constant 5 : index
    %c0_44 = arith.constant 0 : index
    %127 = vector.load %arg8[%c5, %c0_44] : memref<16x32xf32, #tpu.memory_space<vmem>>, vector<1x32xf32>
    %128 = arith.addf %127, %126 : vector<1x32xf32>
    %129 = math.tanh %128 : vector<1x32xf32>
    %cst_45 = arith.constant 5.000000e-01 : f32
    %130 = vector.broadcast %cst_45 : f32 to vector<1x32xf32>
    %131 = arith.mulf %130, %129 : vector<1x32xf32>
    %cst_46 = arith.constant 5.000000e-01 : f32
    %132 = vector.broadcast %cst_46 : f32 to vector<1x32xf32>
    %133 = arith.addf %131, %132 : vector<1x32xf32>
    %134 = vector.extract_strided_slice %133 {offsets = [0, 0], sizes = [1, 8], strides = [1, 1]} : vector<1x32xf32> to vector<1x8xf32>
    %135 = vector.extract_strided_slice %133 {offsets = [0, 8], sizes = [1, 8], strides = [1, 1]} : vector<1x32xf32> to vector<1x8xf32>
    %136 = vector.extract_strided_slice %129 {offsets = [0, 16], sizes = [1, 8], strides = [1, 1]} : vector<1x32xf32> to vector<1x8xf32>
    %137 = vector.extract_strided_slice %133 {offsets = [0, 24], sizes = [1, 8], strides = [1, 1]} : vector<1x32xf32> to vector<1x8xf32>
    %138 = arith.mulf %135, %118 : vector<1x8xf32>
    %139 = arith.mulf %134, %136 : vector<1x8xf32>
    %140 = arith.addf %138, %139 : vector<1x8xf32>
    %141 = math.tanh %140 : vector<1x8xf32>
    %142 = arith.mulf %137, %141 : vector<1x8xf32>
    %c5_47 = arith.constant 5 : index
    %c0_48 = arith.constant 0 : index
    %143 = vector.load %arg9[%c5_47, %c0_48] : memref<16x8xf32, #tpu.memory_space<vmem>>, vector<1x8xf32>
    tpu.vector_store %arg9[%c5_47, %c0_48], %142 {strides = array<i32>} : memref<16x8xf32, #tpu.memory_space<vmem>>, vector<1x8xf32>,
    %144 = vector.shape_cast %142 : vector<1x8xf32> to vector<1x8x1xf32>
    %145 = vector.shape_cast %9 : vector<8x32xf32> to vector<1x8x32xf32>
    %146 = vector.broadcast %144 : vector<1x8x1xf32> to vector<1x8x32xf32>
    %147 = arith.mulf %146, %145 : vector<1x8x32xf32>
    %cst_49 = arith.constant dense<0.000000e+00> : vector<1x32xf32>
    %148 = vector.multi_reduction <add>, %147, %cst_49 [1] : vector<1x8x32xf32> to vector<1x32xf32>
    %c6 = arith.constant 6 : index
    %c0_50 = arith.constant 0 : index
    %149 = vector.load %arg8[%c6, %c0_50] : memref<16x32xf32, #tpu.memory_space<vmem>>, vector<1x32xf32>
    %150 = arith.addf %149, %148 : vector<1x32xf32>
    %151 = math.tanh %150 : vector<1x32xf32>
    %cst_51 = arith.constant 5.000000e-01 : f32
    %152 = vector.broadcast %cst_51 : f32 to vector<1x32xf32>
    %153 = arith.mulf %152, %151 : vector<1x32xf32>
    %cst_52 = arith.constant 5.000000e-01 : f32
    %154 = vector.broadcast %cst_52 : f32 to vector<1x32xf32>
    %155 = arith.addf %153, %154 : vector<1x32xf32>
    %156 = vector.extract_strided_slice %155 {offsets = [0, 0], sizes = [1, 8], strides = [1, 1]} : vector<1x32xf32> to vector<1x8xf32>
    %157 = vector.extract_strided_slice %155 {offsets = [0, 8], sizes = [1, 8], strides = [1, 1]} : vector<1x32xf32> to vector<1x8xf32>
    %158 = vector.extract_strided_slice %151 {offsets = [0, 16], sizes = [1, 8], strides = [1, 1]} : vector<1x32xf32> to vector<1x8xf32>
    %159 = vector.extract_strided_slice %155 {offsets = [0, 24], sizes = [1, 8], strides = [1, 1]} : vector<1x32xf32> to vector<1x8xf32>
    %160 = arith.mulf %157, %140 : vector<1x8xf32>
    %161 = arith.mulf %156, %158 : vector<1x8xf32>
    %162 = arith.addf %160, %161 : vector<1x8xf32>
    %163 = math.tanh %162 : vector<1x8xf32>
    %164 = arith.mulf %159, %163 : vector<1x8xf32>
    %c6_53 = arith.constant 6 : index
    %c0_54 = arith.constant 0 : index
    %165 = vector.load %arg9[%c6_53, %c0_54] : memref<16x8xf32, #tpu.memory_space<vmem>>, vector<1x8xf32>
    tpu.vector_store %arg9[%c6_53, %c0_54], %164 {strides = array<i32>} : memref<16x8xf32, #tpu.memory_space<vmem>>, vector<1x8xf32>,
    %166 = vector.shape_cast %164 : vector<1x8xf32> to vector<1x8x1xf32>
    %167 = vector.shape_cast %9 : vector<8x32xf32> to vector<1x8x32xf32>
    %168 = vector.broadcast %166 : vector<1x8x1xf32> to vector<1x8x32xf32>
    %169 = arith.mulf %168, %167 : vector<1x8x32xf32>
    %cst_55 = arith.constant dense<0.000000e+00> : vector<1x32xf32>
    %170 = vector.multi_reduction <add>, %169, %cst_55 [1] : vector<1x8x32xf32> to vector<1x32xf32>
    %c7 = arith.constant 7 : index
    %c0_56 = arith.constant 0 : index
    %171 = vector.load %arg8[%c7, %c0_56] : memref<16x32xf32, #tpu.memory_space<vmem>>, vector<1x32xf32>
    %172 = arith.addf %171, %170 : vector<1x32xf32>
    %173 = math.tanh %172 : vector<1x32xf32>
    %cst_57 = arith.constant 5.000000e-01 : f32
    %174 = vector.broadcast %cst_57 : f32 to vector<1x32xf32>
    %175 = arith.mulf %174, %173 : vector<1x32xf32>
    %cst_58 = arith.constant 5.000000e-01 : f32
    %176 = vector.broadcast %cst_58 : f32 to vector<1x32xf32>
    %177 = arith.addf %175, %176 : vector<1x32xf32>
    %178 = vector.extract_strided_slice %177 {offsets = [0, 0], sizes = [1, 8], strides = [1, 1]} : vector<1x32xf32> to vector<1x8xf32>
    %179 = vector.extract_strided_slice %177 {offsets = [0, 8], sizes = [1, 8], strides = [1, 1]} : vector<1x32xf32> to vector<1x8xf32>
    %180 = vector.extract_strided_slice %173 {offsets = [0, 16], sizes = [1, 8], strides = [1, 1]} : vector<1x32xf32> to vector<1x8xf32>
    %181 = vector.extract_strided_slice %177 {offsets = [0, 24], sizes = [1, 8], strides = [1, 1]} : vector<1x32xf32> to vector<1x8xf32>
    %182 = arith.mulf %179, %162 : vector<1x8xf32>
    %183 = arith.mulf %178, %180 : vector<1x8xf32>
    %184 = arith.addf %182, %183 : vector<1x8xf32>
    %185 = math.tanh %184 : vector<1x8xf32>
    %186 = arith.mulf %181, %185 : vector<1x8xf32>
    %c7_59 = arith.constant 7 : index
    %c0_60 = arith.constant 0 : index
    %187 = vector.load %arg9[%c7_59, %c0_60] : memref<16x8xf32, #tpu.memory_space<vmem>>, vector<1x8xf32>
    tpu.vector_store %arg9[%c7_59, %c0_60], %186 {strides = array<i32>} : memref<16x8xf32, #tpu.memory_space<vmem>>, vector<1x8xf32>,
    %188 = vector.shape_cast %186 : vector<1x8xf32> to vector<1x8x1xf32>
    %189 = vector.shape_cast %9 : vector<8x32xf32> to vector<1x8x32xf32>
    %190 = vector.broadcast %188 : vector<1x8x1xf32> to vector<1x8x32xf32>
    %191 = arith.mulf %190, %189 : vector<1x8x32xf32>
    %cst_61 = arith.constant dense<0.000000e+00> : vector<1x32xf32>
    %192 = vector.multi_reduction <add>, %191, %cst_61 [1] : vector<1x8x32xf32> to vector<1x32xf32>
    %c8 = arith.constant 8 : index
    %c0_62 = arith.constant 0 : index
    %193 = vector.load %arg8[%c8, %c0_62] : memref<16x32xf32, #tpu.memory_space<vmem>>, vector<1x32xf32>
    %194 = arith.addf %193, %192 : vector<1x32xf32>
    %195 = math.tanh %194 : vector<1x32xf32>
    %cst_63 = arith.constant 5.000000e-01 : f32
    %196 = vector.broadcast %cst_63 : f32 to vector<1x32xf32>
    %197 = arith.mulf %196, %195 : vector<1x32xf32>
    %cst_64 = arith.constant 5.000000e-01 : f32
    %198 = vector.broadcast %cst_64 : f32 to vector<1x32xf32>
    %199 = arith.addf %197, %198 : vector<1x32xf32>
    %200 = vector.extract_strided_slice %199 {offsets = [0, 0], sizes = [1, 8], strides = [1, 1]} : vector<1x32xf32> to vector<1x8xf32>
    %201 = vector.extract_strided_slice %199 {offsets = [0, 8], sizes = [1, 8], strides = [1, 1]} : vector<1x32xf32> to vector<1x8xf32>
    %202 = vector.extract_strided_slice %195 {offsets = [0, 16], sizes = [1, 8], strides = [1, 1]} : vector<1x32xf32> to vector<1x8xf32>
    %203 = vector.extract_strided_slice %199 {offsets = [0, 24], sizes = [1, 8], strides = [1, 1]} : vector<1x32xf32> to vector<1x8xf32>
    %204 = arith.mulf %201, %184 : vector<1x8xf32>
    %205 = arith.mulf %200, %202 : vector<1x8xf32>
    %206 = arith.addf %204, %205 : vector<1x8xf32>
    %207 = math.tanh %206 : vector<1x8xf32>
    %208 = arith.mulf %203, %207 : vector<1x8xf32>
    %c8_65 = arith.constant 8 : index
    %c0_66 = arith.constant 0 : index
    %209 = vector.load %arg9[%c8_65, %c0_66] : memref<16x8xf32, #tpu.memory_space<vmem>>, vector<1x8xf32>
    tpu.vector_store %arg9[%c8_65, %c0_66], %208 {strides = array<i32>} : memref<16x8xf32, #tpu.memory_space<vmem>>, vector<1x8xf32>,
    %210 = vector.shape_cast %208 : vector<1x8xf32> to vector<1x8x1xf32>
    %211 = vector.shape_cast %9 : vector<8x32xf32> to vector<1x8x32xf32>
    %212 = vector.broadcast %210 : vector<1x8x1xf32> to vector<1x8x32xf32>
    %213 = arith.mulf %212, %211 : vector<1x8x32xf32>
    %cst_67 = arith.constant dense<0.000000e+00> : vector<1x32xf32>
    %214 = vector.multi_reduction <add>, %213, %cst_67 [1] : vector<1x8x32xf32> to vector<1x32xf32>
    %c9 = arith.constant 9 : index
    %c0_68 = arith.constant 0 : index
    %215 = vector.load %arg8[%c9, %c0_68] : memref<16x32xf32, #tpu.memory_space<vmem>>, vector<1x32xf32>
    %216 = arith.addf %215, %214 : vector<1x32xf32>
    %217 = math.tanh %216 : vector<1x32xf32>
    %cst_69 = arith.constant 5.000000e-01 : f32
    %218 = vector.broadcast %cst_69 : f32 to vector<1x32xf32>
    %219 = arith.mulf %218, %217 : vector<1x32xf32>
    %cst_70 = arith.constant 5.000000e-01 : f32
    %220 = vector.broadcast %cst_70 : f32 to vector<1x32xf32>
    %221 = arith.addf %219, %220 : vector<1x32xf32>
    %222 = vector.extract_strided_slice %221 {offsets = [0, 0], sizes = [1, 8], strides = [1, 1]} : vector<1x32xf32> to vector<1x8xf32>
    %223 = vector.extract_strided_slice %221 {offsets = [0, 8], sizes = [1, 8], strides = [1, 1]} : vector<1x32xf32> to vector<1x8xf32>
    %224 = vector.extract_strided_slice %217 {offsets = [0, 16], sizes = [1, 8], strides = [1, 1]} : vector<1x32xf32> to vector<1x8xf32>
    %225 = vector.extract_strided_slice %221 {offsets = [0, 24], sizes = [1, 8], strides = [1, 1]} : vector<1x32xf32> to vector<1x8xf32>
    %226 = arith.mulf %223, %206 : vector<1x8xf32>
    %227 = arith.mulf %222, %224 : vector<1x8xf32>
    %228 = arith.addf %226, %227 : vector<1x8xf32>
    %229 = math.tanh %228 : vector<1x8xf32>
    %230 = arith.mulf %225, %229 : vector<1x8xf32>
    %c9_71 = arith.constant 9 : index
    %c0_72 = arith.constant 0 : index
    %231 = vector.load %arg9[%c9_71, %c0_72] : memref<16x8xf32, #tpu.memory_space<vmem>>, vector<1x8xf32>
    tpu.vector_store %arg9[%c9_71, %c0_72], %230 {strides = array<i32>} : memref<16x8xf32, #tpu.memory_space<vmem>>, vector<1x8xf32>,
    %232 = vector.shape_cast %230 : vector<1x8xf32> to vector<1x8x1xf32>
    %233 = vector.shape_cast %9 : vector<8x32xf32> to vector<1x8x32xf32>
    %234 = vector.broadcast %232 : vector<1x8x1xf32> to vector<1x8x32xf32>
    %235 = arith.mulf %234, %233 : vector<1x8x32xf32>
    %cst_73 = arith.constant dense<0.000000e+00> : vector<1x32xf32>
    %236 = vector.multi_reduction <add>, %235, %cst_73 [1] : vector<1x8x32xf32> to vector<1x32xf32>
    %c10 = arith.constant 10 : index
    %c0_74 = arith.constant 0 : index
    %237 = vector.load %arg8[%c10, %c0_74] : memref<16x32xf32, #tpu.memory_space<vmem>>, vector<1x32xf32>
    %238 = arith.addf %237, %236 : vector<1x32xf32>
    %239 = math.tanh %238 : vector<1x32xf32>
    %cst_75 = arith.constant 5.000000e-01 : f32
    %240 = vector.broadcast %cst_75 : f32 to vector<1x32xf32>
    %241 = arith.mulf %240, %239 : vector<1x32xf32>
    %cst_76 = arith.constant 5.000000e-01 : f32
    %242 = vector.broadcast %cst_76 : f32 to vector<1x32xf32>
    %243 = arith.addf %241, %242 : vector<1x32xf32>
    %244 = vector.extract_strided_slice %243 {offsets = [0, 0], sizes = [1, 8], strides = [1, 1]} : vector<1x32xf32> to vector<1x8xf32>
    %245 = vector.extract_strided_slice %243 {offsets = [0, 8], sizes = [1, 8], strides = [1, 1]} : vector<1x32xf32> to vector<1x8xf32>
    %246 = vector.extract_strided_slice %239 {offsets = [0, 16], sizes = [1, 8], strides = [1, 1]} : vector<1x32xf32> to vector<1x8xf32>
    %247 = vector.extract_strided_slice %243 {offsets = [0, 24], sizes = [1, 8], strides = [1, 1]} : vector<1x32xf32> to vector<1x8xf32>
    %248 = arith.mulf %245, %228 : vector<1x8xf32>
    %249 = arith.mulf %244, %246 : vector<1x8xf32>
    %250 = arith.addf %248, %249 : vector<1x8xf32>
    %251 = math.tanh %250 : vector<1x8xf32>
    %252 = arith.mulf %247, %251 : vector<1x8xf32>
    %c10_77 = arith.constant 10 : index
    %c0_78 = arith.constant 0 : index
    %253 = vector.load %arg9[%c10_77, %c0_78] : memref<16x8xf32, #tpu.memory_space<vmem>>, vector<1x8xf32>
    tpu.vector_store %arg9[%c10_77, %c0_78], %252 {strides = array<i32>} : memref<16x8xf32, #tpu.memory_space<vmem>>, vector<1x8xf32>,
    %254 = vector.shape_cast %252 : vector<1x8xf32> to vector<1x8x1xf32>
    %255 = vector.shape_cast %9 : vector<8x32xf32> to vector<1x8x32xf32>
    %256 = vector.broadcast %254 : vector<1x8x1xf32> to vector<1x8x32xf32>
    %257 = arith.mulf %256, %255 : vector<1x8x32xf32>
    %cst_79 = arith.constant dense<0.000000e+00> : vector<1x32xf32>
    %258 = vector.multi_reduction <add>, %257, %cst_79 [1] : vector<1x8x32xf32> to vector<1x32xf32>
    %c11 = arith.constant 11 : index
    %c0_80 = arith.constant 0 : index
    %259 = vector.load %arg8[%c11, %c0_80] : memref<16x32xf32, #tpu.memory_space<vmem>>, vector<1x32xf32>
    %260 = arith.addf %259, %258 : vector<1x32xf32>
    %261 = math.tanh %260 : vector<1x32xf32>
    %cst_81 = arith.constant 5.000000e-01 : f32
    %262 = vector.broadcast %cst_81 : f32 to vector<1x32xf32>
    %263 = arith.mulf %262, %261 : vector<1x32xf32>
    %cst_82 = arith.constant 5.000000e-01 : f32
    %264 = vector.broadcast %cst_82 : f32 to vector<1x32xf32>
    %265 = arith.addf %263, %264 : vector<1x32xf32>
    %266 = vector.extract_strided_slice %265 {offsets = [0, 0], sizes = [1, 8], strides = [1, 1]} : vector<1x32xf32> to vector<1x8xf32>
    %267 = vector.extract_strided_slice %265 {offsets = [0, 8], sizes = [1, 8], strides = [1, 1]} : vector<1x32xf32> to vector<1x8xf32>
    %268 = vector.extract_strided_slice %261 {offsets = [0, 16], sizes = [1, 8], strides = [1, 1]} : vector<1x32xf32> to vector<1x8xf32>
    %269 = vector.extract_strided_slice %265 {offsets = [0, 24], sizes = [1, 8], strides = [1, 1]} : vector<1x32xf32> to vector<1x8xf32>
    %270 = arith.mulf %267, %250 : vector<1x8xf32>
    %271 = arith.mulf %266, %268 : vector<1x8xf32>
    %272 = arith.addf %270, %271 : vector<1x8xf32>
    %273 = math.tanh %272 : vector<1x8xf32>
    %274 = arith.mulf %269, %273 : vector<1x8xf32>
    %c11_83 = arith.constant 11 : index
    %c0_84 = arith.constant 0 : index
    %275 = vector.load %arg9[%c11_83, %c0_84] : memref<16x8xf32, #tpu.memory_space<vmem>>, vector<1x8xf32>
    tpu.vector_store %arg9[%c11_83, %c0_84], %274 {strides = array<i32>} : memref<16x8xf32, #tpu.memory_space<vmem>>, vector<1x8xf32>,
    %276 = vector.shape_cast %274 : vector<1x8xf32> to vector<1x8x1xf32>
    %277 = vector.shape_cast %9 : vector<8x32xf32> to vector<1x8x32xf32>
    %278 = vector.broadcast %276 : vector<1x8x1xf32> to vector<1x8x32xf32>
    %279 = arith.mulf %278, %277 : vector<1x8x32xf32>
    %cst_85 = arith.constant dense<0.000000e+00> : vector<1x32xf32>
    %280 = vector.multi_reduction <add>, %279, %cst_85 [1] : vector<1x8x32xf32> to vector<1x32xf32>
    %c12 = arith.constant 12 : index
    %c0_86 = arith.constant 0 : index
    %281 = vector.load %arg8[%c12, %c0_86] : memref<16x32xf32, #tpu.memory_space<vmem>>, vector<1x32xf32>
    %282 = arith.addf %281, %280 : vector<1x32xf32>
    %283 = math.tanh %282 : vector<1x32xf32>
    %cst_87 = arith.constant 5.000000e-01 : f32
    %284 = vector.broadcast %cst_87 : f32 to vector<1x32xf32>
    %285 = arith.mulf %284, %283 : vector<1x32xf32>
    %cst_88 = arith.constant 5.000000e-01 : f32
    %286 = vector.broadcast %cst_88 : f32 to vector<1x32xf32>
    %287 = arith.addf %285, %286 : vector<1x32xf32>
    %288 = vector.extract_strided_slice %287 {offsets = [0, 0], sizes = [1, 8], strides = [1, 1]} : vector<1x32xf32> to vector<1x8xf32>
    %289 = vector.extract_strided_slice %287 {offsets = [0, 8], sizes = [1, 8], strides = [1, 1]} : vector<1x32xf32> to vector<1x8xf32>
    %290 = vector.extract_strided_slice %283 {offsets = [0, 16], sizes = [1, 8], strides = [1, 1]} : vector<1x32xf32> to vector<1x8xf32>
    %291 = vector.extract_strided_slice %287 {offsets = [0, 24], sizes = [1, 8], strides = [1, 1]} : vector<1x32xf32> to vector<1x8xf32>
    %292 = arith.mulf %289, %272 : vector<1x8xf32>
    %293 = arith.mulf %288, %290 : vector<1x8xf32>
    %294 = arith.addf %292, %293 : vector<1x8xf32>
    %295 = math.tanh %294 : vector<1x8xf32>
    %296 = arith.mulf %291, %295 : vector<1x8xf32>
    %c12_89 = arith.constant 12 : index
    %c0_90 = arith.constant 0 : index
    %297 = vector.load %arg9[%c12_89, %c0_90] : memref<16x8xf32, #tpu.memory_space<vmem>>, vector<1x8xf32>
    tpu.vector_store %arg9[%c12_89, %c0_90], %296 {strides = array<i32>} : memref<16x8xf32, #tpu.memory_space<vmem>>, vector<1x8xf32>,
    %298 = vector.shape_cast %296 : vector<1x8xf32> to vector<1x8x1xf32>
    %299 = vector.shape_cast %9 : vector<8x32xf32> to vector<1x8x32xf32>
    %300 = vector.broadcast %298 : vector<1x8x1xf32> to vector<1x8x32xf32>
    %301 = arith.mulf %300, %299 : vector<1x8x32xf32>
    %cst_91 = arith.constant dense<0.000000e+00> : vector<1x32xf32>
    %302 = vector.multi_reduction <add>, %301, %cst_91 [1] : vector<1x8x32xf32> to vector<1x32xf32>
    %c13 = arith.constant 13 : index
    %c0_92 = arith.constant 0 : index
    %303 = vector.load %arg8[%c13, %c0_92] : memref<16x32xf32, #tpu.memory_space<vmem>>, vector<1x32xf32>
    %304 = arith.addf %303, %302 : vector<1x32xf32>
    %305 = math.tanh %304 : vector<1x32xf32>
    %cst_93 = arith.constant 5.000000e-01 : f32
    %306 = vector.broadcast %cst_93 : f32 to vector<1x32xf32>
    %307 = arith.mulf %306, %305 : vector<1x32xf32>
    %cst_94 = arith.constant 5.000000e-01 : f32
    %308 = vector.broadcast %cst_94 : f32 to vector<1x32xf32>
    %309 = arith.addf %307, %308 : vector<1x32xf32>
    %310 = vector.extract_strided_slice %309 {offsets = [0, 0], sizes = [1, 8], strides = [1, 1]} : vector<1x32xf32> to vector<1x8xf32>
    %311 = vector.extract_strided_slice %309 {offsets = [0, 8], sizes = [1, 8], strides = [1, 1]} : vector<1x32xf32> to vector<1x8xf32>
    %312 = vector.extract_strided_slice %305 {offsets = [0, 16], sizes = [1, 8], strides = [1, 1]} : vector<1x32xf32> to vector<1x8xf32>
    %313 = vector.extract_strided_slice %309 {offsets = [0, 24], sizes = [1, 8], strides = [1, 1]} : vector<1x32xf32> to vector<1x8xf32>
    %314 = arith.mulf %311, %294 : vector<1x8xf32>
    %315 = arith.mulf %310, %312 : vector<1x8xf32>
    %316 = arith.addf %314, %315 : vector<1x8xf32>
    %317 = math.tanh %316 : vector<1x8xf32>
    %318 = arith.mulf %313, %317 : vector<1x8xf32>
    %c13_95 = arith.constant 13 : index
    %c0_96 = arith.constant 0 : index
    %319 = vector.load %arg9[%c13_95, %c0_96] : memref<16x8xf32, #tpu.memory_space<vmem>>, vector<1x8xf32>
    tpu.vector_store %arg9[%c13_95, %c0_96], %318 {strides = array<i32>} : memref<16x8xf32, #tpu.memory_space<vmem>>, vector<1x8xf32>,
    %320 = vector.shape_cast %318 : vector<1x8xf32> to vector<1x8x1xf32>
    %321 = vector.shape_cast %9 : vector<8x32xf32> to vector<1x8x32xf32>
    %322 = vector.broadcast %320 : vector<1x8x1xf32> to vector<1x8x32xf32>
    %323 = arith.mulf %322, %321 : vector<1x8x32xf32>
    %cst_97 = arith.constant dense<0.000000e+00> : vector<1x32xf32>
    %324 = vector.multi_reduction <add>, %323, %cst_97 [1] : vector<1x8x32xf32> to vector<1x32xf32>
    %c14 = arith.constant 14 : index
    %c0_98 = arith.constant 0 : index
    %325 = vector.load %arg8[%c14, %c0_98] : memref<16x32xf32, #tpu.memory_space<vmem>>, vector<1x32xf32>
    %326 = arith.addf %325, %324 : vector<1x32xf32>
    %327 = math.tanh %326 : vector<1x32xf32>
    %cst_99 = arith.constant 5.000000e-01 : f32
    %328 = vector.broadcast %cst_99 : f32 to vector<1x32xf32>
    %329 = arith.mulf %328, %327 : vector<1x32xf32>
    %cst_100 = arith.constant 5.000000e-01 : f32
    %330 = vector.broadcast %cst_100 : f32 to vector<1x32xf32>
    %331 = arith.addf %329, %330 : vector<1x32xf32>
    %332 = vector.extract_strided_slice %331 {offsets = [0, 0], sizes = [1, 8], strides = [1, 1]} : vector<1x32xf32> to vector<1x8xf32>
    %333 = vector.extract_strided_slice %331 {offsets = [0, 8], sizes = [1, 8], strides = [1, 1]} : vector<1x32xf32> to vector<1x8xf32>
    %334 = vector.extract_strided_slice %327 {offsets = [0, 16], sizes = [1, 8], strides = [1, 1]} : vector<1x32xf32> to vector<1x8xf32>
    %335 = vector.extract_strided_slice %331 {offsets = [0, 24], sizes = [1, 8], strides = [1, 1]} : vector<1x32xf32> to vector<1x8xf32>
    %336 = arith.mulf %333, %316 : vector<1x8xf32>
    %337 = arith.mulf %332, %334 : vector<1x8xf32>
    %338 = arith.addf %336, %337 : vector<1x8xf32>
    %339 = math.tanh %338 : vector<1x8xf32>
    %340 = arith.mulf %335, %339 : vector<1x8xf32>
    %c14_101 = arith.constant 14 : index
    %c0_102 = arith.constant 0 : index
    %341 = vector.load %arg9[%c14_101, %c0_102] : memref<16x8xf32, #tpu.memory_space<vmem>>, vector<1x8xf32>
    tpu.vector_store %arg9[%c14_101, %c0_102], %340 {strides = array<i32>} : memref<16x8xf32, #tpu.memory_space<vmem>>, vector<1x8xf32>,
    %342 = vector.shape_cast %340 : vector<1x8xf32> to vector<1x8x1xf32>
    %343 = vector.shape_cast %9 : vector<8x32xf32> to vector<1x8x32xf32>
    %344 = vector.broadcast %342 : vector<1x8x1xf32> to vector<1x8x32xf32>
    %345 = arith.mulf %344, %343 : vector<1x8x32xf32>
    %cst_103 = arith.constant dense<0.000000e+00> : vector<1x32xf32>
    %346 = vector.multi_reduction <add>, %345, %cst_103 [1] : vector<1x8x32xf32> to vector<1x32xf32>
    %c15 = arith.constant 15 : index
    %c0_104 = arith.constant 0 : index
    %347 = vector.load %arg8[%c15, %c0_104] : memref<16x32xf32, #tpu.memory_space<vmem>>, vector<1x32xf32>
    %348 = arith.addf %347, %346 : vector<1x32xf32>
    %349 = math.tanh %348 : vector<1x32xf32>
    %cst_105 = arith.constant 5.000000e-01 : f32
    %350 = vector.broadcast %cst_105 : f32 to vector<1x32xf32>
    %351 = arith.mulf %350, %349 : vector<1x32xf32>
    %cst_106 = arith.constant 5.000000e-01 : f32
    %352 = vector.broadcast %cst_106 : f32 to vector<1x32xf32>
    %353 = arith.addf %351, %352 : vector<1x32xf32>
    %354 = vector.extract_strided_slice %353 {offsets = [0, 0], sizes = [1, 8], strides = [1, 1]} : vector<1x32xf32> to vector<1x8xf32>
    %355 = vector.extract_strided_slice %353 {offsets = [0, 8], sizes = [1, 8], strides = [1, 1]} : vector<1x32xf32> to vector<1x8xf32>
    %356 = vector.extract_strided_slice %349 {offsets = [0, 16], sizes = [1, 8], strides = [1, 1]} : vector<1x32xf32> to vector<1x8xf32>
    %357 = vector.extract_strided_slice %353 {offsets = [0, 24], sizes = [1, 8], strides = [1, 1]} : vector<1x32xf32> to vector<1x8xf32>
    %358 = arith.mulf %355, %338 : vector<1x8xf32>
    %359 = arith.mulf %354, %356 : vector<1x8xf32>
    %360 = arith.addf %358, %359 : vector<1x8xf32>
    %361 = math.tanh %360 : vector<1x8xf32>
    %362 = arith.mulf %357, %361 : vector<1x8xf32>
    %c15_107 = arith.constant 15 : index
    %c0_108 = arith.constant 0 : index
    %363 = vector.load %arg9[%c15_107, %c0_108] : memref<16x8xf32, #tpu.memory_space<vmem>>, vector<1x8xf32>
    tpu.vector_store %arg9[%c15_107, %c0_108], %362 {strides = array<i32>} : memref<16x8xf32, #tpu.memory_space<vmem>>, vector<1x8xf32>,
    %c0_109 = arith.constant 0 : index
    %c0_110 = arith.constant 0 : index
    %364 = vector.load %arg9[%c0_109, %c0_110] : memref<16x8xf32, #tpu.memory_space<vmem>>, vector<16x8xf32>
    %c0_111 = arith.constant 0 : index
    %c0_112 = arith.constant 0 : index
    %365 = vector.load %arg4[%c0_111, %c0_112] : memref<1x8xf32, #tpu.memory_space<vmem>>, vector<1x8xf32>
    %366 = vector.broadcast %365 : vector<1x8xf32> to vector<16x8xf32>
    %367 = arith.mulf %364, %366 : vector<16x8xf32>
    %cst_113 = arith.constant dense<0.000000e+00> : vector<16xf32>
    %368 = vector.multi_reduction <add>, %367, %cst_113 [1] : vector<16x8xf32> to vector<16xf32>
    %369 = vector.shape_cast %368 : vector<16xf32> to vector<16x1xf32>
    %c0_114 = arith.constant 0 : index
    %c0_115 = arith.constant 0 : index
    %370 = vector.load %arg7[%c0_114, %c0_115] : memref<16x1xf32, #tpu.memory_space<vmem>>, vector<16x1xf32>
    tpu.vector_store %arg7[%c0_114, %c0_115], %369 {strides = array<i32>} : memref<16x1xf32, #tpu.memory_space<vmem>>, vector<16x1xf32>,
    return
  }
}

</mosaic_0001>

<llo_original>
// kernel: stock_lstm_forward.1
$region0: #{stock_lstm_forward.1}
  #allocation0 [shape = 'u32[]', space=smem, size = 0x4, offset = 0x4, fixed_abs, tag = 'smem constant byte address 0x4 - core index']
  #allocation1 [shape = 'u32[144,128]{1,0:T(1,128)}', space=vmem, size = 0x12000, scoped, tag = 'internal scratch']
  #allocation2 [shape = 'f32[16,32]{1,0:T(8,128)}', space=vmem, size = 0x2000, scoped, tag = 'scratch operand']
  #allocation3 [shape = 'f32[16,8]{1,0:T(8,128)}', space=vmem, size = 0x2000, scoped, tag = 'scratch operand']
  %s0 = inlined_call_operand.vmem [shape: f32[16,1], index: 0, kind: input, shape index: {}]
  %s1 = inlined_call_operand.vmem [shape: f32[1,32], index: 1, kind: input, shape index: {}]
  %s2 = inlined_call_operand.vmem [shape: f32[8,32], index: 2, kind: input, shape index: {}]
  %s3 = inlined_call_operand.vmem [shape: f32[1,32], index: 3, kind: input, shape index: {}]
  %s4 = inlined_call_operand.vmem [shape: f32[1,8], index: 4, kind: input, shape index: {}]
  %s5 = inlined_call_operand.vmem [shape: f32[1,8], index: 5, kind: input, shape index: {}]
  %s6 = inlined_call_operand.vmem [shape: f32[1,8], index: 6, kind: input, shape index: {}]
  %s7 = inlined_call_operand.vmem [shape: f32[16,1], index: 7, kind: output, shape index: {}]
  %s8 = sld [smem:[#allocation0]]
  $region38: #{stock_lstm_forward.1} parent=0
    _
  %s10 = ssub.s32 1, %s8
  %s11 = scalar_select 0, %s10, %s8
  // Predicated region
  $region2: #{stock_lstm_forward.1} parent=0 // pred_check
    _
  $region3: #{stock_lstm_forward.1} parent=0 // pred_check_branch
    %13 = sbr.rel (0) target = $region5
  $region4: #{stock_lstm_forward.1} parent=0 // pred_region
    _
  $region5: #{stock_lstm_forward.1} parent=0 // pred_fallthru
    _
  // Predicated region
  $region6: #{stock_lstm_forward.1} parent=0 // pred_check
    _
  $region7: #{stock_lstm_forward.1} parent=0 // pred_check_branch
    %15 = sbr.rel (0) target = $region9
  $region8: #{stock_lstm_forward.1} parent=0 // pred_region
    _
  $region9: #{stock_lstm_forward.1} parent=0 // pred_fallthru
    _
  // Predicated region
  $region10: #{stock_lstm_forward.1} parent=0 // pred_check
    _
  $region11: #{stock_lstm_forward.1} parent=0 // pred_check_branch
    %17 = sbr.rel (0) target = $region13
  $region12: #{stock_lstm_forward.1} parent=0 // pred_region
    _
  $region13: #{stock_lstm_forward.1} parent=0 // pred_fallthru
    _
  // Predicated region
  $region14: #{stock_lstm_forward.1} parent=0 // pred_check
    _
  $region15: #{stock_lstm_forward.1} parent=0 // pred_check_branch
    %19 = sbr.rel (0) target = $region17
  $region16: #{stock_lstm_forward.1} parent=0 // pred_region
    _
  $region17: #{stock_lstm_forward.1} parent=0 // pred_fallthru
    _
  // Predicated region
  $region18: #{stock_lstm_forward.1} parent=0 // pred_check
    _
  $region19: #{stock_lstm_forward.1} parent=0 // pred_check_branch
    %21 = sbr.rel (0) target = $region21
  $region20: #{stock_lstm_forward.1} parent=0 // pred_region
    _
  $region21: #{stock_lstm_forward.1} parent=0 // pred_fallthru
    _
  // Predicated region
  $region22: #{stock_lstm_forward.1} parent=0 // pred_check
    _
  $region23: #{stock_lstm_forward.1} parent=0 // pred_check_branch
    %23 = sbr.rel (0) target = $region25
  $region24: #{stock_lstm_forward.1} parent=0 // pred_region
    _
  $region25: #{stock_lstm_forward.1} parent=0 // pred_fallthru
    _
  // Predicated region
  $region26: #{stock_lstm_forward.1} parent=0 // pred_check
    _
  $region27: #{stock_lstm_forward.1} parent=0 // pred_check_branch
    %25 = sbr.rel (0) target = $region29
  $region28: #{stock_lstm_forward.1} parent=0 // pred_region
    _
  $region29: #{stock_lstm_forward.1} parent=0 // pred_fallthru
    _
  %v26 = vld [vmem:[%s0] sm:$0xff]
  %v27 = vld [vmem:[%s0 + $0x8] sm:$0xff]
  %v28 = vld [vmem:[%s1] sm:$0x1]
  %30 = vset.pattern.permute.xlu0 0
  %31 = vperm.xlu0 %30, %v26
  %v32 = vpop.permute.xlu0 %31
  %35 = vset.pattern.permute.xlu0 0
  %36 = vperm.xlu0 %35, %v27
  %v37 = vpop.permute.xlu0 %36
  %v40 = vlaneseq
  %v41 = vshrl.u32 %v40, 7
  %v42 = vsub.s32 0, %v41
  %v43 = vrot.slane %v28, %v42
  %v45 = vmul.f32 %v32, %v43
  %v46 = vmul.f32 %v37, %v43
  %v47 = vld [vmem:[%s3] sm:$0x1]
  %v49 = vlaneseq
  %v50 = vshrl.u32 %v49, 7
  %v51 = vsub.s32 0, %v50
  %v52 = vrot.slane %v47, %v51
  %v54 = vadd.f32 %v45, %v52
  %v55 = vadd.f32 %v46, %v52
  %vm56 = vcmask 261120
  %57 = vst.msk [vmem:[#allocation2] sm:$0xff] %vm56, %v54
  %58 = vst.msk [vmem:[#allocation2 + $0x8] sm:$0xff] %vm56, %v55
  %v59 = vld [vmem:[%s2] sm:$0xff]
  %v60 = vld [vmem:[%s5] sm:$0x1]
  %v61 = vld [vmem:[%s6] sm:$0x1]
  %v62 = vlaneseq
  %v63 = vshrl.u32 %v62, 7
  %v64 = vsub.s32 0, %v63
  %v65 = vrot.slane %v60, %v64
  %67 = vbcast.lane.b32.xlu0 %v65, 256
  %v68 = vpop.permute.xlu0 %67
  %v69 = vmul.f32 %v68, %v59
  %v70 = vsel %vm56, %v69, 0.0
  %v71 = vrot.slane %v70, 4
  %v72 = vadd.f32 %v70, %v71
  %v73 = vrot.slane %v72, 2
  %v74 = vadd.f32 %v72, %v73
  %v75 = vrot.slane %v74, 1
  %v76 = vadd.f32 %v74, %v75
  %v77 = vld [vmem:[#allocation2] sm:$0x1]
  %v78 = vadd.f32 %v77, %v76
  %v79 = vtanh.pop %v78
  %v80 = vmul.f32 %v79, 0.5
  %v81 = vadd.f32 %v80, 0.5
  %v83 = vlaneseq
  %v84 = vshrl.u32 %v83, 7
  %v85 = vsub.s32 0, %v84
  %v86 = vrot.slane %v61, %v85
  %87 = vrot.lane.b32.xlu0 %v86, 8
  %v88 = vpop.permute.xlu0 %87
  %v90 = vmul.f32 %v81, %v88
  %92 = vrot.lane.b32.xlu0 %v79, 112
  %v93 = vpop.permute.xlu0 %92
  %v95 = vmul.f32 %v81, %v93
  %97 = vrot.lane.b32.xlu0 %v95, 8
  %v98 = vpop.permute.xlu0 %97
  %v100 = vadd.f32 %v90, %v98
  %v101 = vtanh.pop %v100
  %103 = vrot.lane.b32.xlu0 %v101, 16
  %v104 = vpop.permute.xlu0 %103
  %v106 = vmul.f32 %v81, %v104
  %108 = vrot.lane.b32.xlu0 %v106, 104
  %v109 = vpop.permute.xlu0 %108
  %vm111 = vcmask 57344
  %112 = vst.msk [vmem:[#allocation3] sm:$0x1] %vm111, %v109
  %v113 = vlaneseq
  %v114 = vshrl.u32 %v113, 7
  %v115 = vsub.s32 0, %v114
  %v116 = vrot.slane %v106, %v115
  %s118 = sor.u32 256, 24
  %119 = vbcast.lane.b32.xlu0 %v116, %s118
  %v120 = vpop.permute.xlu0 %119
  %v121 = vmul.f32 %v120, %v59
  %v122 = vsel %vm56, %v121, 0.0
  %v123 = vrot.slane %v122, 4
  %v124 = vadd.f32 %v122, %v123
  %v125 = vrot.slane %v124, 2
  %v126 = vadd.f32 %v124, %v125
  %v127 = vrot.slane %v126, 1
  %v128 = vadd.f32 %v126, %v127
  %v129 = vld [vmem:[#allocation2 + $0x1] sm:$0x1]
  %v130 = vadd.f32 %v129, %v128
  %v131 = vtanh.pop %v130
  %v132 = vmul.f32 %v131, 0.5
  %v133 = vadd.f32 %v132, 0.5
  %v134 = vmul.f32 %v133, %v100
  %136 = vrot.lane.b32.xlu0 %v131, 112
  %v137 = vpop.permute.xlu0 %136
  %v139 = vmul.f32 %v133, %v137
  %141 = vrot.lane.b32.xlu0 %v139, 8
  %v142 = vpop.permute.xlu0 %141
  %v144 = vadd.f32 %v134, %v142
  %v145 = vtanh.pop %v144
  %147 = vrot.lane.b32.xlu0 %v145, 16
  %v148 = vpop.permute.xlu0 %147
  %v150 = vmul.f32 %v133, %v148
  %152 = vrot.lane.b32.xlu0 %v150, 104
  %v153 = vpop.permute.xlu0 %152
  %155 = vst.msk [vmem:[#allocation3 + $0x1] sm:$0x1] %vm111, %v153
  %v156 = vlaneseq
  %v157 = vshrl.u32 %v156, 7
  %v158 = vsub.s32 0, %v157
  %v159 = vrot.slane %v150, %v158
  %s161 = sor.u32 256, 24
  %162 = vbcast.lane.b32.xlu0 %v159, %s161
  %v163 = vpop.permute.xlu0 %162
  %v164 = vmul.f32 %v163, %v59
  %v165 = vsel %vm56, %v164, 0.0
  %v166 = vrot.slane %v165, 4
  %v167 = vadd.f32 %v165, %v166
  %v168 = vrot.slane %v167, 2
  %v169 = vadd.f32 %v167, %v168
  %v170 = vrot.slane %v169, 1
  %v171 = vadd.f32 %v169, %v170
  %v172 = vld [vmem:[#allocation2 + $0x2] sm:$0x1]
  %v173 = vadd.f32 %v172, %v171
  %v174 = vtanh.pop %v173
  %v175 = vmul.f32 %v174, 0.5
  %v176 = vadd.f32 %v175, 0.5
  %v177 = vmul.f32 %v176, %v144
  %179 = vrot.lane.b32.xlu0 %v174, 112
  %v180 = vpop.permute.xlu0 %179
  %v182 = vmul.f32 %v176, %v180
  %184 = vrot.lane.b32.xlu0 %v182, 8
  %v185 = vpop.permute.xlu0 %184
  %v187 = vadd.f32 %v177, %v185
  %v188 = vtanh.pop %v187
  %190 = vrot.lane.b32.xlu0 %v188, 16
  %v191 = vpop.permute.xlu0 %190
  %v193 = vmul.f32 %v176, %v191
  %195 = vrot.lane.b32.xlu0 %v193, 104
  %v196 = vpop.permute.xlu0 %195
  %198 = vst.msk [vmem:[#allocation3 + $0x2] sm:$0x1] %vm111, %v196
  %v199 = vlaneseq
  %v200 = vshrl.u32 %v199, 7
  %v201 = vsub.s32 0, %v200
  %v202 = vrot.slane %v193, %v201
  %s204 = sor.u32 256, 24
  %205 = vbcast.lane.b32.xlu0 %v202, %s204
  %v206 = vpop.permute.xlu0 %205
  %v207 = vmul.f32 %v206, %v59
  %v208 = vsel %vm56, %v207, 0.0
  %v209 = vrot.slane %v208, 4
  %v210 = vadd.f32 %v208, %v209
  %v211 = vrot.slane %v210, 2
  %v212 = vadd.f32 %v210, %v211
  %v213 = vrot.slane %v212, 1
  %v214 = vadd.f32 %v212, %v213
  %v215 = vld [vmem:[#allocation2 + $0x3] sm:$0x1]
  %v216 = vadd.f32 %v215, %v214
  %v217 = vtanh.pop %v216
  %v218 = vmul.f32 %v217, 0.5
  %v219 = vadd.f32 %v218, 0.5
  %v220 = vmul.f32 %v219, %v187
  %222 = vrot.lane.b32.xlu0 %v217, 112
  %v223 = vpop.permute.xlu0 %222
  %v225 = vmul.f32 %v219, %v223
  %227 = vrot.lane.b32.xlu0 %v225, 8
  %v228 = vpop.permute.xlu0 %227
  %v230 = vadd.f32 %v220, %v228
  %v231 = vtanh.pop %v230
  %233 = vrot.lane.b32.xlu0 %v231, 16
  %v234 = vpop.permute.xlu0 %233
  %v236 = vmul.f32 %v219, %v234
  %238 = vrot.lane.b32.xlu0 %v236, 104
  %v239 = vpop.permute.xlu0 %238
  %241 = vst.msk [vmem:[#allocation3 + $0x3] sm:$0x1] %vm111, %v239
  %v242 = vlaneseq
  %v243 = vshrl.u32 %v242, 7
  %v244 = vsub.s32 0, %v243
  %v245 = vrot.slane %v236, %v244
  %s247 = sor.u32 256, 24
  %248 = vbcast.lane.b32.xlu0 %v245, %s247
  %v249 = vpop.permute.xlu0 %248
  %v250 = vmul.f32 %v249, %v59
  %v251 = vsel %vm56, %v250, 0.0
  %v252 = vrot.slane %v251, 4
  %v253 = vadd.f32 %v251, %v252
  %v254 = vrot.slane %v253, 2
  %v255 = vadd.f32 %v253, %v254
  %v256 = vrot.slane %v255, 1
  %v257 = vadd.f32 %v255, %v256
  %v258 = vld [vmem:[#allocation2 + $0x4] sm:$0x1]
  %v259 = vadd.f32 %v258, %v257
  %v260 = vtanh.pop %v259
  %v261 = vmul.f32 %v260, 0.5
  %v262 = vadd.f32 %v261, 0.5
  %v263 = vmul.f32 %v262, %v230
  %265 = vrot.lane.b32.xlu0 %v260, 112
  %v266 = vpop.permute.xlu0 %265
  %v268 = vmul.f32 %v262, %v266
  %270 = vrot.lane.b32.xlu0 %v268, 8
  %v271 = vpop.permute.xlu0 %270
  %v273 = vadd.f32 %v263, %v271
  %v274 = vtanh.pop %v273
  %276 = vrot.lane.b32.xlu0 %v274, 16
  %v277 = vpop.permute.xlu0 %276
  %v279 = vmul.f32 %v262, %v277
  %281 = vrot.lane.b32.xlu0 %v279, 104
  %v282 = vpop.permute.xlu0 %281
  %284 = vst.msk [vmem:[#allocation3 + $0x4] sm:$0x1] %vm111, %v282
  %v285 = vlaneseq
  %v286 = vshrl.u32 %v285, 7
  %v287 = vsub.s32 0, %v286
  %v288 = vrot.slane %v279, %v287
  %s290 = sor.u32 256, 24
  %291 = vbcast.lane.b32.xlu0 %v288, %s290
  %v292 = vpop.permute.xlu0 %291
  %v293 = vmul.f32 %v292, %v59
  %v294 = vsel %vm56, %v293, 0.0
  %v295 = vrot.slane %v294, 4
  %v296 = vadd.f32 %v294, %v295
  %v297 = vrot.slane %v296, 2
  %v298 = vadd.f32 %v296, %v297
  %v299 = vrot.slane %v298, 1
  %v300 = vadd.f32 %v298, %v299
  %v301 = vld [vmem:[#allocation2 + $0x5] sm:$0x1]
  %v302 = vadd.f32 %v301, %v300
  %v303 = vtanh.pop %v302
  %v304 = vmul.f32 %v303, 0.5
  %v305 = vadd.f32 %v304, 0.5
  %v306 = vmul.f32 %v305, %v273
  %308 = vrot.lane.b32.xlu0 %v303, 112
  %v309 = vpop.permute.xlu0 %308
  %v311 = vmul.f32 %v305, %v309
  %313 = vrot.lane.b32.xlu0 %v311, 8
  %v314 = vpop.permute.xlu0 %313
  %v316 = vadd.f32 %v306, %v314
  %v317 = vtanh.pop %v316
  %319 = vrot.lane.b32.xlu0 %v317, 16
  %v320 = vpop.permute.xlu0 %319
  %v322 = vmul.f32 %v305, %v320
  %324 = vrot.lane.b32.xlu0 %v322, 104
  %v325 = vpop.permute.xlu0 %324
  %327 = vst.msk [vmem:[#allocation3 + $0x5] sm:$0x1] %vm111, %v325
  %v328 = vlaneseq
  %v329 = vshrl.u32 %v328, 7
  %v330 = vsub.s32 0, %v329
  %v331 = vrot.slane %v322, %v330
  %s333 = sor.u32 256, 24
  %334 = vbcast.lane.b32.xlu0 %v331, %s333
  %v335 = vpop.permute.xlu0 %334
  %v336 = vmul.f32 %v335, %v59
  %v337 = vsel %vm56, %v336, 0.0
  %v338 = vrot.slane %v337, 4
  %v339 = vadd.f32 %v337, %v338
  %v340 = vrot.slane %v339, 2
  %v341 = vadd.f32 %v339, %v340
  %v342 = vrot.slane %v341, 1
  %v343 = vadd.f32 %v341, %v342
  %v344 = vld [vmem:[#allocation2 + $0x6] sm:$0x1]
  %v345 = vadd.f32 %v344, %v343
  %v346 = vtanh.pop %v345
  %v347 = vmul.f32 %v346, 0.5
  %v348 = vadd.f32 %v347, 0.5
  %v349 = vmul.f32 %v348, %v316
  %351 = vrot.lane.b32.xlu0 %v346, 112
  %v352 = vpop.permute.xlu0 %351
  %v354 = vmul.f32 %v348, %v352
  %356 = vrot.lane.b32.xlu0 %v354, 8
  %v357 = vpop.permute.xlu0 %356
  %v359 = vadd.f32 %v349, %v357
  %v360 = vtanh.pop %v359
  %362 = vrot.lane.b32.xlu0 %v360, 16
  %v363 = vpop.permute.xlu0 %362
  %v365 = vmul.f32 %v348, %v363
  %367 = vrot.lane.b32.xlu0 %v365, 104
  %v368 = vpop.permute.xlu0 %367
  %370 = vst.msk [vmem:[#allocation3 + $0x6] sm:$0x1] %vm111, %v368
  %v371 = vlaneseq
  %v372 = vshrl.u32 %v371, 7
  %v373 = vsub.s32 0, %v372
  %v374 = vrot.slane %v365, %v373
  %s376 = sor.u32 256, 24
  %377 = vbcast.lane.b32.xlu0 %v374, %s376
  %v378 = vpop.permute.xlu0 %377
  %v379 = vmul.f32 %v378, %v59
  %v380 = vsel %vm56, %v379, 0.0
  %v381 = vrot.slane %v380, 4
  %v382 = vadd.f32 %v380, %v381
  %v383 = vrot.slane %v382, 2
  %v384 = vadd.f32 %v382, %v383
  %v385 = vrot.slane %v384, 1
  %v386 = vadd.f32 %v384, %v385
  %v387 = vld [vmem:[#allocation2 + $0x7] sm:$0x1]
  %v388 = vadd.f32 %v387, %v386
  %v389 = vtanh.pop %v388
  %v390 = vmul.f32 %v389, 0.5
  %v391 = vadd.f32 %v390, 0.5
  %v392 = vmul.f32 %v391, %v359
  %394 = vrot.lane.b32.xlu0 %v389, 112
  %v395 = vpop.permute.xlu0 %394
  %v397 = vmul.f32 %v391, %v395
  %399 = vrot.lane.b32.xlu0 %v397, 8
  %v400 = vpop.permute.xlu0 %399
  %v402 = vadd.f32 %v392, %v400
  %v403 = vtanh.pop %v402
  %405 = vrot.lane.b32.xlu0 %v403, 16
  %v406 = vpop.permute.xlu0 %405
  %v408 = vmul.f32 %v391, %v406
  %410 = vrot.lane.b32.xlu0 %v408, 104
  %v411 = vpop.permute.xlu0 %410
  %413 = vst.msk [vmem:[#allocation3 + $0x7] sm:$0x1] %vm111, %v411
  %v414 = vlaneseq
  %v415 = vshrl.u32 %v414, 7
  %v416 = vsub.s32 0, %v415
  %v417 = vrot.slane %v408, %v416
  %s419 = sor.u32 256, 24
  %420 = vbcast.lane.b32.xlu0 %v417, %s419
  %v421 = vpop.permute.xlu0 %420
  %v422 = vmul.f32 %v421, %v59
  %v423 = vsel %vm56, %v422, 0.0
  %v424 = vrot.slane %v423, 4
  %v425 = vadd.f32 %v423, %v424
  %v426 = vrot.slane %v425, 2
  %v427 = vadd.f32 %v425, %v426
  %v428 = vrot.slane %v427, 1
  %v429 = vadd.f32 %v427, %v428
  %v430 = vld [vmem:[#allocation2 + $0x8] sm:$0x1]
  %v431 = vadd.f32 %v430, %v429
  %v432 = vtanh.pop %v431
  %v433 = vmul.f32 %v432, 0.5
  %v434 = vadd.f32 %v433, 0.5
  %v435 = vmul.f32 %v434, %v402
  %437 = vrot.lane.b32.xlu0 %v432, 112
  %v438 = vpop.permute.xlu0 %437
  %v440 = vmul.f32 %v434, %v438
  %442 = vrot.lane.b32.xlu0 %v440, 8
  %v443 = vpop.permute.xlu0 %442
  %v445 = vadd.f32 %v435, %v443
  %v446 = vtanh.pop %v445
  %448 = vrot.lane.b32.xlu0 %v446, 16
  %v449 = vpop.permute.xlu0 %448
  %v451 = vmul.f32 %v434, %v449
  %453 = vrot.lane.b32.xlu0 %v451, 104
  %v454 = vpop.permute.xlu0 %453
  %456 = vst.msk [vmem:[#allocation3 + $0x8] sm:$0x1] %vm111, %v454
  %v457 = vlaneseq
  %v458 = vshrl.u32 %v457, 7
  %v459 = vsub.s32 0, %v458
  %v460 = vrot.slane %v451, %v459
  %s462 = sor.u32 256, 24
  %463 = vbcast.lane.b32.xlu0 %v460, %s462
  %v464 = vpop.permute.xlu0 %463
  %v465 = vmul.f32 %v464, %v59
  %v466 = vsel %vm56, %v465, 0.0
  %v467 = vrot.slane %v466, 4
  %v468 = vadd.f32 %v466, %v467
  %v469 = vrot.slane %v468, 2
  %v470 = vadd.f32 %v468, %v469
  %v471 = vrot.slane %v470, 1
  %v472 = vadd.f32 %v470, %v471
  %v473 = vld [vmem:[#allocation2 + $0x9] sm:$0x1]
  %v474 = vadd.f32 %v473, %v472
  %v475 = vtanh.pop %v474
  %v476 = vmul.f32 %v475, 0.5
  %v477 = vadd.f32 %v476, 0.5
  %v478 = vmul.f32 %v477, %v445
  %480 = vrot.lane.b32.xlu0 %v475, 112
  %v481 = vpop.permute.xlu0 %480
  %v483 = vmul.f32 %v477, %v481
  %485 = vrot.lane.b32.xlu0 %v483, 8
  %v486 = vpop.permute.xlu0 %485
  %v488 = vadd.f32 %v478, %v486
  %v489 = vtanh.pop %v488
  %491 = vrot.lane.b32.xlu0 %v489, 16
  %v492 = vpop.permute.xlu0 %491
  %v494 = vmul.f32 %v477, %v492
  %496 = vrot.lane.b32.xlu0 %v494, 104
  %v497 = vpop.permute.xlu0 %496
  %499 = vst.msk [vmem:[#allocation3 + $0x9] sm:$0x1] %vm111, %v497
  %v500 = vlaneseq
  %v501 = vshrl.u32 %v500, 7
  %v502 = vsub.s32 0, %v501
  %v503 = vrot.slane %v494, %v502
  %s505 = sor.u32 256, 24
  %506 = vbcast.lane.b32.xlu0 %v503, %s505
  %v507 = vpop.permute.xlu0 %506
  %v508 = vmul.f32 %v507, %v59
  %v509 = vsel %vm56, %v508, 0.0
  %v510 = vrot.slane %v509, 4
  %v511 = vadd.f32 %v509, %v510
  %v512 = vrot.slane %v511, 2
  %v513 = vadd.f32 %v511, %v512
  %v514 = vrot.slane %v513, 1
  %v515 = vadd.f32 %v513, %v514
  %v516 = vld [vmem:[#allocation2 + $0xa] sm:$0x1]
  %v517 = vadd.f32 %v516, %v515
  %v518 = vtanh.pop %v517
  %v519 = vmul.f32 %v518, 0.5
  %v520 = vadd.f32 %v519, 0.5
  %v521 = vmul.f32 %v520, %v488
  %523 = vrot.lane.b32.xlu0 %v518, 112
  %v524 = vpop.permute.xlu0 %523
  %v526 = vmul.f32 %v520, %v524
  %528 = vrot.lane.b32.xlu0 %v526, 8
  %v529 = vpop.permute.xlu0 %528
  %v531 = vadd.f32 %v521, %v529
  %v532 = vtanh.pop %v531
  %534 = vrot.lane.b32.xlu0 %v532, 16
  %v535 = vpop.permute.xlu0 %534
  %v537 = vmul.f32 %v520, %v535
  %539 = vrot.lane.b32.xlu0 %v537, 104
  %v540 = vpop.permute.xlu0 %539
  %542 = vst.msk [vmem:[#allocation3 + $0xa] sm:$0x1] %vm111, %v540
  %v543 = vlaneseq
  %v544 = vshrl.u32 %v543, 7
  %v545 = vsub.s32 0, %v544
  %v546 = vrot.slane %v537, %v545
  %s548 = sor.u32 256, 24
  %549 = vbcast.lane.b32.xlu0 %v546, %s548
  %v550 = vpop.permute.xlu0 %549
  %v551 = vmul.f32 %v550, %v59
  %v552 = vsel %vm56, %v551, 0.0
  %v553 = vrot.slane %v552, 4
  %v554 = vadd.f32 %v552, %v553
  %v555 = vrot.slane %v554, 2
  %v556 = vadd.f32 %v554, %v555
  %v557 = vrot.slane %v556, 1
  %v558 = vadd.f32 %v556, %v557
  %v559 = vld [vmem:[#allocation2 + $0xb] sm:$0x1]
  %v560 = vadd.f32 %v559, %v558
  %v561 = vtanh.pop %v560
  %v562 = vmul.f32 %v561, 0.5
  %v563 = vadd.f32 %v562, 0.5
  %v564 = vmul.f32 %v563, %v531
  %566 = vrot.lane.b32.xlu0 %v561, 112
  %v567 = vpop.permute.xlu0 %566
  %v569 = vmul.f32 %v563, %v567
  %571 = vrot.lane.b32.xlu0 %v569, 8
  %v572 = vpop.permute.xlu0 %571
  %v574 = vadd.f32 %v564, %v572
  %v575 = vtanh.pop %v574
  %577 = vrot.lane.b32.xlu0 %v575, 16
  %v578 = vpop.permute.xlu0 %577
  %v580 = vmul.f32 %v563, %v578
  %582 = vrot.lane.b32.xlu0 %v580, 104
  %v583 = vpop.permute.xlu0 %582
  %585 = vst.msk [vmem:[#allocation3 + $0xb] sm:$0x1] %vm111, %v583
  %v586 = vlaneseq
  %v587 = vshrl.u32 %v586, 7
  %v588 = vsub.s32 0, %v587
  %v589 = vrot.slane %v580, %v588
  %s591 = sor.u32 256, 24
  %592 = vbcast.lane.b32.xlu0 %v589, %s591
  %v593 = vpop.permute.xlu0 %592
  %v594 = vmul.f32 %v593, %v59
  %v595 = vsel %vm56, %v594, 0.0
  %v596 = vrot.slane %v595, 4
  %v597 = vadd.f32 %v595, %v596
  %v598 = vrot.slane %v597, 2
  %v599 = vadd.f32 %v597, %v598
  %v600 = vrot.slane %v599, 1
  %v601 = vadd.f32 %v599, %v600
  %v602 = vld [vmem:[#allocation2 + $0xc] sm:$0x1]
  %v603 = vadd.f32 %v602, %v601
  %v604 = vtanh.pop %v603
  %v605 = vmul.f32 %v604, 0.5
  %v606 = vadd.f32 %v605, 0.5
  %v607 = vmul.f32 %v606, %v574
  %609 = vrot.lane.b32.xlu0 %v604, 112
  %v610 = vpop.permute.xlu0 %609
  %v612 = vmul.f32 %v606, %v610
  %614 = vrot.lane.b32.xlu0 %v612, 8
  %v615 = vpop.permute.xlu0 %614
  %v617 = vadd.f32 %v607, %v615
  %v618 = vtanh.pop %v617
  %620 = vrot.lane.b32.xlu0 %v618, 16
  %v621 = vpop.permute.xlu0 %620
  %v623 = vmul.f32 %v606, %v621
  %625 = vrot.lane.b32.xlu0 %v623, 104
  %v626 = vpop.permute.xlu0 %625
  %628 = vst.msk [vmem:[#allocation3 + $0xc] sm:$0x1] %vm111, %v626
  %v629 = vlaneseq
  %v630 = vshrl.u32 %v629, 7
  %v631 = vsub.s32 0, %v630
  %v632 = vrot.slane %v623, %v631
  %s634 = sor.u32 256, 24
  %635 = vbcast.lane.b32.xlu0 %v632, %s634
  %v636 = vpop.permute.xlu0 %635
  %v637 = vmul.f32 %v636, %v59
  %v638 = vsel %vm56, %v637, 0.0
  %v639 = vrot.slane %v638, 4
  %v640 = vadd.f32 %v638, %v639
  %v641 = vrot.slane %v640, 2
  %v642 = vadd.f32 %v640, %v641
  %v643 = vrot.slane %v642, 1
  %v644 = vadd.f32 %v642, %v643
  %v645 = vld [vmem:[#allocation2 + $0xd] sm:$0x1]
  %v646 = vadd.f32 %v645, %v644
  %v647 = vtanh.pop %v646
  %v648 = vmul.f32 %v647, 0.5
  %v649 = vadd.f32 %v648, 0.5
  %v650 = vmul.f32 %v649, %v617
  %652 = vrot.lane.b32.xlu0 %v647, 112
  %v653 = vpop.permute.xlu0 %652
  %v655 = vmul.f32 %v649, %v653
  %657 = vrot.lane.b32.xlu0 %v655, 8
  %v658 = vpop.permute.xlu0 %657
  %v660 = vadd.f32 %v650, %v658
  %v661 = vtanh.pop %v660
  %663 = vrot.lane.b32.xlu0 %v661, 16
  %v664 = vpop.permute.xlu0 %663
  %v666 = vmul.f32 %v649, %v664
  %668 = vrot.lane.b32.xlu0 %v666, 104
  %v669 = vpop.permute.xlu0 %668
  %671 = vst.msk [vmem:[#allocation3 + $0xd] sm:$0x1] %vm111, %v669
  %v672 = vlaneseq
  %v673 = vshrl.u32 %v672, 7
  %v674 = vsub.s32 0, %v673
  %v675 = vrot.slane %v666, %v674
  %s677 = sor.u32 256, 24
  %678 = vbcast.lane.b32.xlu0 %v675, %s677
  %v679 = vpop.permute.xlu0 %678
  %v680 = vmul.f32 %v679, %v59
  %v681 = vsel %vm56, %v680, 0.0
  %v682 = vrot.slane %v681, 4
  %v683 = vadd.f32 %v681, %v682
  %v684 = vrot.slane %v683, 2
  %v685 = vadd.f32 %v683, %v684
  %v686 = vrot.slane %v685, 1
  %v687 = vadd.f32 %v685, %v686
  %v688 = vld [vmem:[#allocation2 + $0xe] sm:$0x1]
  %v689 = vadd.f32 %v688, %v687
  %v690 = vtanh.pop %v689
  %v691 = vmul.f32 %v690, 0.5
  %v692 = vadd.f32 %v691, 0.5
  %v693 = vmul.f32 %v692, %v660
  %695 = vrot.lane.b32.xlu0 %v690, 112
  %v696 = vpop.permute.xlu0 %695
  %v698 = vmul.f32 %v692, %v696
  %700 = vrot.lane.b32.xlu0 %v698, 8
  %v701 = vpop.permute.xlu0 %700
  %v703 = vadd.f32 %v693, %v701
  %v704 = vtanh.pop %v703
  %706 = vrot.lane.b32.xlu0 %v704, 16
  %v707 = vpop.permute.xlu0 %706
  %v709 = vmul.f32 %v692, %v707
  %711 = vrot.lane.b32.xlu0 %v709, 104
  %v712 = vpop.permute.xlu0 %711
  %714 = vst.msk [vmem:[#allocation3 + $0xe] sm:$0x1] %vm111, %v712
  %v715 = vlaneseq
  %v716 = vshrl.u32 %v715, 7
  %v717 = vsub.s32 0, %v716
  %v718 = vrot.slane %v709, %v717
  %s720 = sor.u32 256, 24
  %721 = vbcast.lane.b32.xlu0 %v718, %s720
  %v722 = vpop.permute.xlu0 %721
  %v723 = vmul.f32 %v722, %v59
  %v724 = vsel %vm56, %v723, 0.0
  %v725 = vrot.slane %v724, 4
  %v726 = vadd.f32 %v724, %v725
  %v727 = vrot.slane %v726, 2
  %v728 = vadd.f32 %v726, %v727
  %v729 = vrot.slane %v728, 1
  %v730 = vadd.f32 %v728, %v729
  %v731 = vld [vmem:[#allocation2 + $0xf] sm:$0x1]
  %v732 = vadd.f32 %v731, %v730
  %v733 = vtanh.pop %v732
  %v734 = vmul.f32 %v733, 0.5
  %v735 = vadd.f32 %v734, 0.5
  %v736 = vmul.f32 %v735, %v703
  %738 = vrot.lane.b32.xlu0 %v733, 112
  %v739 = vpop.permute.xlu0 %738
  %v741 = vmul.f32 %v735, %v739
  %743 = vrot.lane.b32.xlu0 %v741, 8
  %v744 = vpop.permute.xlu0 %743
  %v746 = vadd.f32 %v736, %v744
  %v747 = vtanh.pop %v746
  %749 = vrot.lane.b32.xlu0 %v747, 16
  %v750 = vpop.permute.xlu0 %749
  %v752 = vmul.f32 %v735, %v750
  %754 = vrot.lane.b32.xlu0 %v752, 104
  %v755 = vpop.permute.xlu0 %754
  %757 = vst.msk [vmem:[#allocation3 + $0xf] sm:$0x1] %vm111, %v755
  %v758 = vld [vmem:[#allocation3] sm:$0xff]
  %v759 = vld [vmem:[#allocation3 + $0x8] sm:$0xff]
  %v760 = vld [vmem:[%s4] sm:$0x1]
  %v762 = vlaneseq
  %v763 = vshrl.u32 %v762, 7
  %v764 = vsub.s32 0, %v763
  %v765 = vrot.slane %v760, %v764
  %v767 = vmul.f32 %v758, %v765
  %v768 = vmul.f32 %v759, %v765
  %vm769 = vcmask 64512
  %v770 = vsel %vm769, %v767, 0.0
  %771 = vadd.xlane.f32.xlu0 %v770
  %v772 = vpop.xlane.xlu0 %771
  %v773 = vsel %vm769, %v768, 0.0
  %774 = vadd.xlane.f32.xlu0 %v773
  %v775 = vpop.xlane.xlu0 %774
  %vm776 = vcmask 7168
  %777 = vst.msk [vmem:[%s7] sm:$0xff] %vm776, %v772
  %778 = vst.msk [vmem:[%s7 + $0x8] sm:$0xff] %vm776, %v775
  // Predicated region
  $region30: #{stock_lstm_forward.1} parent=0 // pred_check
    _
  $region31: #{stock_lstm_forward.1} parent=0 // pred_check_branch
    %780 = sbr.rel (0) target = $region33
  $region32: #{stock_lstm_forward.1} parent=0 // pred_region
    _
  $region33: #{stock_lstm_forward.1} parent=0 // pred_fallthru
    _
  // Predicated region
  $region34: #{stock_lstm_forward.1} parent=0 // pred_check
    _
  $region35: #{stock_lstm_forward.1} parent=0 // pred_check_branch
    %782 = sbr.rel (0) target = $region37
  $region36: #{stock_lstm_forward.1} parent=0 // pred_region
    _
  $region37: #{stock_lstm_forward.1} parent=0 // pred_fallthru
    _

</llo_original>
